<compile_context>
chip_gen: v5e
topology: v5e:2x2
jax: 0.10.0
libtpu: 0.0.40
codegen_flags: <defaults>
</compile_context>

<pallas_src>
import jax
import jax.numpy as jnp
from jax import lax
from jax.experimental import pallas as pl
from jax.experimental.pallas import tpu as pltpu


# ----------------------------------------------------------------------------
# Fused kernel: one grid step per batch element. All weights resident in VMEM.
# ----------------------------------------------------------------------------
def _fused_st_core_kernel(lap_ref, wt_ref, bt_ref, wg_ref, bg_ref,
                          w1_ref, b1_ref, x_ref, gated_ref, xin_ref):
    # lap_ref: (K, N, N)                      Chebyshev polynomials T_k(adj)
    # wt_ref:  (c_in*L, c_out*Lmid)           Toeplitz-folded time_conv weight
    # bt_ref:  (1, c_out*Lmid)                time_conv bias (replicated per lo)
    # wg_ref:  (K, c_out*Lmid, 2*c_out*Lg)    Toeplitz-folded GCN (1,Kt) weight
    # bg_ref:  (1, 2*c_out*Lg)                GCN bias (replicated per lo)
    # w1_ref:  (c_in*L, c_out*L)              1x1 conv1 weight (block-diagonal fold)
    # b1_ref:  (1, c_out*L)                   conv1 bias
    # x_ref:   (N, c_in*L)                    one batch of x, node-major
    # gated_ref: (N, c_out*Lg)                sigmoid(gate)*leaky_relu(filter)
    # xin_ref:   (N, c_out*L)                 conv1(x) residual branch
    k_cheb = lap_ref.shape[0]
    n_nodes = x_ref.shape[0]
    lanes_mid = wt_ref.shape[1]
    lanes_gcn = wg_ref.shape[2]
    lanes_in1 = w1_ref.shape[1]

    x = x_ref[...]

    # --- conv1 (1x1, c_in -> c_out): residual branch x_input -----------------
    xin = jnp.dot(x, w1_ref[...], preferred_element_type=jnp.float32)
    xin = xin + jnp.broadcast_to(b1_ref[...], (n_nodes, lanes_in1))
    xin_ref[...] = xin.astype(xin_ref.dtype)

    # --- time_conv (1,Kt) + bias + leaky_relu ---------------------------------
    h1 = jnp.dot(x, wt_ref[...], preferred_element_type=jnp.float32)
    h1 = h1 + jnp.broadcast_to(bt_ref[...], (n_nodes, lanes_mid))
    h1 = jnp.where(h1 >= 0.0, h1, 0.01 * h1)          # F.leaky_relu (slope 0.01)

    # --- dynamic_gcn: Chebyshev graph conv + (1,Kt) temporal conv -------------
    # acc[q, (o,lo)] = b[o] + sum_k sum_n T_k[q,n] * sum_{(c,l)} h1[n,(c,l)] * Wk[(c,l),(o,lo)]
    acc = jnp.broadcast_to(bg_ref[...], (n_nodes, lanes_gcn)).astype(jnp.float32)
    for k in range(k_cheb):                            # K tiny & static -> unrolled
        h = jnp.dot(lap_ref[k], h1, preferred_element_type=jnp.float32)
        acc = acc + jnp.dot(h, wg_ref[k], preferred_element_type=jnp.float32)

    # --- GLU-style gate: sigmoid(gate) * leaky_relu(filter) -------------------
    half = lanes_gcn // 2                              # filter = first c_out chans
    filt = acc[:, :half]
    gate = acc[:, half:]
    gate_s = 1.0 / (1.0 + jnp.exp(-gate))
    gated = gate_s * jnp.where(filt >= 0.0, filt, 0.01 * filt)
    gated_ref[...] = gated.astype(gated_ref.dtype)


# ----------------------------------------------------------------------------
# Glue (plain JAX): Chebyshev stack, Toeplitz weight folds, x layout prep.
# ----------------------------------------------------------------------------
def cheby_polynomials(adj, K):
    # Matches the PyTorch recurrence: T0 = I, T1 = adj, T_k = 2*adj@T_{k-1} - T_{k-2}.
    N = adj.shape[0]
    l0 = jnp.eye(N, dtype=adj.dtype)
    l1 = adj
    Ls = [l0, l1]
    for _ in range(2, K):
        l2 = 2.0 * (adj @ l1) - l0
        l0, l1 = l1, l2
        Ls.append(l2)
    return jnp.stack(Ls, axis=0)                       # (K, N, N)


def _toeplitz_1d(w_oct, l_in, l_out, kt, pad):
    """w_oct: (O, C, Kt) -> (C*l_in, O*l_out) block-Toeplitz for a (1,Kt) conv.

    T[(c,l), (o,lo)] = w_oct[o, c, l - lo + pad] if the tap index is in [0, Kt), else 0.
    """
    o_dim, c_dim, _ = w_oct.shape
    l = jnp.arange(l_in)[:, None]
    lo = jnp.arange(l_out)[None, :]
    t = l - lo + pad
    valid = (t >= 0) & (t < kt)
    tc = jnp.clip(t, 0, kt - 1)
    wg = w_oct[:, :, tc]                               # (O, C, l_in, l_out)
    wg = jnp.where(valid[None, None], wg, 0.0)
    return jnp.transpose(wg, (1, 2, 0, 3)).reshape(c_dim * l_in, o_dim * l_out)


def st_block_core_pallas(x, adj, w_time, b_time, w_gcn, b_gcn, w1, b1, K, Kt):
    """Fused ST_BLOCK core (eval mode, dropout = identity).

    x:      (B, c_in, N, L) f32
    adj:    (N, N)
    w_time: (c_out, c_in, 1, Kt),        b_time: (c_out,)
    w_gcn:  (2*c_out, K*c_out, 1, Kt),   b_gcn:  (2*c_out,)
    w1:     (c_out, c_in, 1, 1),         b1:     (c_out,)
    Returns (gated, x_input):
      gated:   (B, c_out, N, L + 6 - 2*Kt)   = sigmoid(gate)*leaky_relu(filter)
      x_input: (B, c_out, N, L)              = conv1(x)
    """
    B, c_in, N, L = x.shape
    c_out = w_time.shape[0]
    Lmid = L + 3 - Kt                                  # time_conv output length
    Lg = Lmid + 3 - Kt                                 # dynamic_gcn output length

    lap = cheby_polynomials(adj, K)                    # (K, N, N)

    # Toeplitz folds (padding (0,1) baked in; one-time weight prep, reusable).
    wt_toep = _toeplitz_1d(w_time[:, :, 0, :], L, Lmid, Kt, pad=1)         # (c_in*L, c_out*Lmid)
    w4 = w_gcn[:, :, 0, :].reshape(2 * c_out, c_out, K, Kt)                # channel m = c*K + k
    wg_toep = jnp.stack(
        [_toeplitz_1d(w4[:, :, k, :], Lmid, Lg, Kt, pad=1) for k in range(K)],
        axis=0)                                                            # (K, c_out*Lmid, 2*c_out*Lg)
    w1_toep = _toeplitz_1d(w1[:, :, 0, :], L, L, 1, pad=0)                 # (c_in*L, c_out*L)

    bt_row = jnp.repeat(b_time, Lmid)[None, :]                             # (1, c_out*Lmid)
    bg_row = jnp.repeat(b_gcn, Lg)[None, :]                                # (1, 2*c_out*Lg)
    b1_row = jnp.repeat(b1, L)[None, :]                                    # (1, c_out*L)

    # Only XLA-side data movement on activations: node-major relayout of x.
    x_nm = jnp.transpose(x, (0, 2, 1, 3)).reshape(B, N, c_in * L)

    gated, xin = pl.pallas_call(
        _fused_st_core_kernel,
        out_shape=(
            jax.ShapeDtypeStruct((B, N, c_out * Lg), x.dtype),
            jax.ShapeDtypeStruct((B, N, c_out * L), x.dtype),
        ),
        grid=(B,),
        in_specs=[
            pl.BlockSpec((K, N, N), lambda b: (0, 0, 0)),                        # resident
            pl.BlockSpec((c_in * L, c_out * Lmid), lambda b: (0, 0)),            # resident
            pl.BlockSpec((1, c_out * Lmid), lambda b: (0, 0)),                   # resident
            pl.BlockSpec((K, c_out * Lmid, 2 * c_out * Lg), lambda b: (0, 0, 0)),# resident
            pl.BlockSpec((1, 2 * c_out * Lg), lambda b: (0, 0)),                 # resident
            pl.BlockSpec((c_in * L, c_out * L), lambda b: (0, 0)),               # resident
            pl.BlockSpec((1, c_out * L), lambda b: (0, 0)),                      # resident
            pl.BlockSpec((None, N, c_in * L), lambda b: (b, 0, 0)),
        ],
        out_specs=[
            pl.BlockSpec((None, N, c_out * Lg), lambda b: (b, 0, 0)),
            pl.BlockSpec((None, N, c_out * L), lambda b: (b, 0, 0)),
        ],
        compiler_params=pltpu.CompilerParams(
            dimension_semantics=("parallel",),
            vmem_limit_bytes=32 * 1024 * 1024,
        ),
    )(lap, wt_toep, bt_row, wg_toep, bg_row, w1_toep, b1_row, x_nm)

    # Lane-dense kernel outputs -> NCHW (wrapper-side layout plumbing only).
    gated_nchw = gated.reshape(B, N, c_out, Lg).transpose(0, 2, 1, 3)
    xin_nchw = xin.reshape(B, N, c_out, L).transpose(0, 2, 1, 3)
    return gated_nchw, xin_nchw


# ----------------------------------------------------------------------------
# Pure-JAX reference mirroring the PyTorch forward (eval mode) exactly
# ----------------------------------------------------------------------------
def st_block_core_ref(x, adj, w_time, b_time, w_gcn, b_gcn, w1, b1, K, Kt):
    prec = lax.Precision.HIGHEST
    # time_conv + leaky_relu (dropout identity at eval)
    x1 = lax.conv_general_dilated(
        x, w_time, (1, 1), ((0, 0), (1, 1)),
        dimension_numbers=('NCHW', 'OIHW', 'NCHW'), precision=prec)
    x1 = x1 + b_time[None, :, None, None]
    x1 = jnp.where(x1 >= 0.0, x1, 0.01 * x1)
    # dynamic_gcn (T_cheby_conv)
    lap = cheby_polynomials(adj, K)
    lap_t = jnp.swapaxes(lap, -1, -2)
    xk = jnp.einsum('bcnl,knq->bckql', x1, lap_t, precision=prec)
    Bb, c_mid, N, Lm = x1.shape
    xk = xk.reshape(Bb, c_mid * K, N, Lm)
    y = lax.conv_general_dilated(
        xk, w_gcn, (1, 1), ((0, 0), (1, 1)),
        dimension_numbers=('NCHW', 'OIHW', 'NCHW'), precision=prec)
    y = y + b_gcn[None, :, None, None]
    # split + gate
    c_half = y.shape[1] // 2
    filt, gate = y[:, :c_half], y[:, c_half:]
    gated = jax.nn.sigmoid(gate) * jnp.where(filt >= 0.0, filt, 0.01 * filt)
    # conv1 residual branch
    x_input = jnp.einsum('bcnl,oc->bonl', x, w1[:, :, 0, 0], precision=prec)
    x_input = x_input + b1[None, :, None, None]
    return gated, x_input


if __name__ == "__main__":
    B, c_in, c_out, N, L = 2, 4, 8, 16, 16
    K, Kt = 3, 3

    key = jax.random.PRNGKey(0)
    kx, ka, k1, k2, k3, k4, k5, k6 = jax.random.split(key, 8)
    x = jax.random.normal(kx, (B, c_in, N, L), jnp.float32)
    a = jax.random.normal(ka, (N, N), jnp.float32)
    adj = (a + a.T) / (2.0 * jnp.sqrt(jnp.float32(N)))              # symmetric "laplacian"
    w_time = 0.1 * jax.random.normal(k1, (c_out, c_in, 1, Kt), jnp.float32)
    b_time = 0.1 * jax.random.normal(k2, (c_out,), jnp.float32)
    w_gcn = 0.1 * jax.random.normal(k3, (2 * c_out, K * c_out, 1, Kt), jnp.float32)
    b_gcn = 0.1 * jax.random.normal(k4, (2 * c_out,), jnp.float32)
    w1 = 0.1 * jax.random.normal(k5, (c_out, c_in, 1, 1), jnp.float32)
    b1 = 0.1 * jax.random.normal(k6, (c_out,), jnp.float32)

    gated, x_input = st_block_core_pallas(
        x, adj, w_time, b_time, w_gcn, b_gcn, w1, b1, K, Kt)
    gated = jax.block_until_ready(gated)
    x_input = jax.block_until_ready(x_input)

    gated_ref, xin_ref = st_block_core_ref(
        x, adj, w_time, b_time, w_gcn, b_gcn, w1, b1, K, Kt)

    assert gated.shape == (B, c_out, N, L + 6 - 2 * Kt), gated.shape
    assert x_input.shape == (B, c_out, N, L), x_input.shape
    err1 = float(jnp.max(jnp.abs(gated - gated_ref)))
    err2 = float(jnp.max(jnp.abs(x_input - xin_ref)))
    assert err1 < 1e-2, f"gated max abs err {err1}"
    assert err2 < 1e-2, f"x_input max abs err {err2}"
    print("KERNEL_OK")
</pallas_src>

<mosaic_0001>
module attributes {stable_mosaic.version = 11 : i64} {
  func.func @_fused_st_core_kernel(%arg0: i32, %arg1: memref<3x16x16xf32, #tpu.memory_space<vmem>>, %arg2: memref<64x128xf32, #tpu.memory_space<vmem>>, %arg3: memref<1x128xf32, #tpu.memory_space<vmem>>, %arg4: memref<3x128x256xf32, #tpu.memory_space<vmem>>, %arg5: memref<1x256xf32, #tpu.memory_space<vmem>>, %arg6: memref<64x128xf32, #tpu.memory_space<vmem>>, %arg7: memref<1x128xf32, #tpu.memory_space<vmem>>, %arg8: memref<1x16x64xf32, #tpu.memory_space<vmem>>, %arg9: memref<1x16x128xf32, #tpu.memory_space<vmem>>, %arg10: memref<1x16x128xf32, #tpu.memory_space<vmem>>) attributes {dimension_semantics = [#tpu.dimension_semantics<parallel>], iteration_bounds = array<i64: 2>, scalar_prefetch = 0 : i64, scratch_operands = 0 : i64, tpu.core_type = #tpu.core_type<tc>, window_params = [{pipeline_mode = #tpu.pipeline_mode<synchronous>, transform_indices = @transform_0, window_bounds = array<i64: 3, 16, 16>}, {pipeline_mode = #tpu.pipeline_mode<synchronous>, transform_indices = @transform_1, window_bounds = array<i64: 64, 128>}, {pipeline_mode = #tpu.pipeline_mode<synchronous>, transform_indices = @transform_2, window_bounds = array<i64: 1, 128>}, {pipeline_mode = #tpu.pipeline_mode<synchronous>, transform_indices = @transform_3, window_bounds = array<i64: 3, 128, 256>}, {pipeline_mode = #tpu.pipeline_mode<synchronous>, transform_indices = @transform_4, window_bounds = array<i64: 1, 256>}, {pipeline_mode = #tpu.pipeline_mode<synchronous>, transform_indices = @transform_5, window_bounds = array<i64: 64, 128>}, {pipeline_mode = #tpu.pipeline_mode<synchronous>, transform_indices = @transform_6, window_bounds = array<i64: 1, 128>}, {transform_indices = @transform_7, window_bounds = array<i64: 1, 16, 64>}, {transform_indices = @transform_8, window_bounds = array<i64: 1, 16, 128>}, {transform_indices = @transform_9, window_bounds = array<i64: 1, 16, 128>}]} {
    %c0 = arith.constant 0 : index
    %c0_0 = arith.constant 0 : index
    %c0_1 = arith.constant 0 : index
    %0 = vector.load %arg8[%c0, %c0_0, %c0_1] : memref<1x16x64xf32, #tpu.memory_space<vmem>>, vector<1x16x64xf32>
    %1 = vector.shape_cast %0 : vector<1x16x64xf32> to vector<16x64xf32>
    %c0_2 = arith.constant 0 : index
    %c0_3 = arith.constant 0 : index
    %2 = vector.load %arg6[%c0_2, %c0_3] : memref<64x128xf32, #tpu.memory_space<vmem>>, vector<64x128xf32>
    %cst = arith.constant dense<0.000000e+00> : vector<16x128xf32>
    %3 = tpu.matmul %1, %2, %cst {dimension_numbers = #tpu.dot_dimension_numbers<[1], [0], [0], [1], [0, 0, 1, 1], [], []>} : vector<16x64xf32>, vector<64x128xf32>, vector<16x128xf32> -> vector<16x128xf32>
    %c0_4 = arith.constant 0 : index
    %c0_5 = arith.constant 0 : index
    %4 = vector.load %arg7[%c0_4, %c0_5] : memref<1x128xf32, #tpu.memory_space<vmem>>, vector<1x128xf32>
    %5 = vector.shape_cast %4 : vector<1x128xf32> to vector<1x128xf32>
    %6 = vector.broadcast %5 : vector<1x128xf32> to vector<16x128xf32>
    %7 = arith.addf %3, %6 : vector<16x128xf32>
    %c0_6 = arith.constant 0 : index
    %c0_7 = arith.constant 0 : index
    %c0_8 = arith.constant 0 : index
    %8 = vector.load %arg10[%c0_6, %c0_7, %c0_8] : memref<1x16x128xf32, #tpu.memory_space<vmem>>, vector<1x16x128xf32>
    %9 = vector.shape_cast %8 : vector<1x16x128xf32> to vector<16x128xf32>
    %10 = vector.shape_cast %7 : vector<16x128xf32> to vector<1x16x128xf32>
    tpu.vector_store %arg10[%c0_6, %c0_7, %c0_8], %10 {strides = array<i32>} : memref<1x16x128xf32, #tpu.memory_space<vmem>>, vector<1x16x128xf32>,
    %c0_9 = arith.constant 0 : index
    %c0_10 = arith.constant 0 : index
    %11 = vector.load %arg2[%c0_9, %c0_10] : memref<64x128xf32, #tpu.memory_space<vmem>>, vector<64x128xf32>
    %cst_11 = arith.constant dense<0.000000e+00> : vector<16x128xf32>
    %12 = tpu.matmul %1, %11, %cst_11 {dimension_numbers = #tpu.dot_dimension_numbers<[1], [0], [0], [1], [0, 0, 1, 1], [], []>} : vector<16x64xf32>, vector<64x128xf32>, vector<16x128xf32> -> vector<16x128xf32>
    %c0_12 = arith.constant 0 : index
    %c0_13 = arith.constant 0 : index
    %13 = vector.load %arg3[%c0_12, %c0_13] : memref<1x128xf32, #tpu.memory_space<vmem>>, vector<1x128xf32>
    %14 = vector.shape_cast %13 : vector<1x128xf32> to vector<1x128xf32>
    %15 = vector.broadcast %14 : vector<1x128xf32> to vector<16x128xf32>
    %16 = arith.addf %12, %15 : vector<16x128xf32>
    %cst_14 = arith.constant 0.000000e+00 : f32
    %17 = vector.broadcast %cst_14 : f32 to vector<16x128xf32>
    %18 = arith.cmpf oge, %16, %17 : vector<16x128xf32>
    %cst_15 = arith.constant 0.00999999977 : f32
    %19 = vector.broadcast %cst_15 : f32 to vector<16x128xf32>
    %20 = arith.mulf %19, %16 : vector<16x128xf32>
    %21 = arith.select %18, %16, %20 : vector<16x128xi1>, vector<16x128xf32>
    %c0_16 = arith.constant 0 : index
    %c0_17 = arith.constant 0 : index
    %22 = vector.load %arg5[%c0_16, %c0_17] : memref<1x256xf32, #tpu.memory_space<vmem>>, vector<1x256xf32>
    %23 = vector.shape_cast %22 : vector<1x256xf32> to vector<1x256xf32>
    %24 = vector.broadcast %23 : vector<1x256xf32> to vector<16x256xf32>
    %c0_18 = arith.constant 0 : index
    %c0_19 = arith.constant 0 : index
    %c0_20 = arith.constant 0 : index
    %25 = vector.load %arg1[%c0_18, %c0_19, %c0_20] : memref<3x16x16xf32, #tpu.memory_space<vmem>>, vector<1x16x16xf32>
    %26 = vector.shape_cast %25 : vector<1x16x16xf32> to vector<16x16xf32>
    %cst_21 = arith.constant dense<0.000000e+00> : vector<16x128xf32>
    %27 = tpu.matmul %26, %21, %cst_21 {dimension_numbers = #tpu.dot_dimension_numbers<[1], [0], [0], [1], [0, 0, 1, 1], [], []>} : vector<16x16xf32>, vector<16x128xf32>, vector<16x128xf32> -> vector<16x128xf32>
    %c0_22 = arith.constant 0 : index
    %c0_23 = arith.constant 0 : index
    %c0_24 = arith.constant 0 : index
    %28 = vector.load %arg4[%c0_22, %c0_23, %c0_24] : memref<3x128x256xf32, #tpu.memory_space<vmem>>, vector<1x128x256xf32>
    %29 = vector.shape_cast %28 : vector<1x128x256xf32> to vector<128x256xf32>
    %cst_25 = arith.constant dense<0.000000e+00> : vector<16x256xf32>
    %30 = tpu.matmul %27, %29, %cst_25 {dimension_numbers = #tpu.dot_dimension_numbers<[1], [0], [0], [1], [0, 0, 1, 1], [], []>} : vector<16x128xf32>, vector<128x256xf32>, vector<16x256xf32> -> vector<16x256xf32>
    %31 = arith.addf %24, %30 : vector<16x256xf32>
    %c1 = arith.constant 1 : index
    %c0_26 = arith.constant 0 : index
    %c0_27 = arith.constant 0 : index
    %32 = vector.load %arg1[%c1, %c0_26, %c0_27] : memref<3x16x16xf32, #tpu.memory_space<vmem>>, vector<1x16x16xf32>
    %33 = vector.shape_cast %32 : vector<1x16x16xf32> to vector<16x16xf32>
    %cst_28 = arith.constant dense<0.000000e+00> : vector<16x128xf32>
    %34 = tpu.matmul %33, %21, %cst_28 {dimension_numbers = #tpu.dot_dimension_numbers<[1], [0], [0], [1], [0, 0, 1, 1], [], []>} : vector<16x16xf32>, vector<16x128xf32>, vector<16x128xf32> -> vector<16x128xf32>
    %c1_29 = arith.constant 1 : index
    %c0_30 = arith.constant 0 : index
    %c0_31 = arith.constant 0 : index
    %35 = vector.load %arg4[%c1_29, %c0_30, %c0_31] : memref<3x128x256xf32, #tpu.memory_space<vmem>>, vector<1x128x256xf32>
    %36 = vector.shape_cast %35 : vector<1x128x256xf32> to vector<128x256xf32>
    %cst_32 = arith.constant dense<0.000000e+00> : vector<16x256xf32>
    %37 = tpu.matmul %34, %36, %cst_32 {dimension_numbers = #tpu.dot_dimension_numbers<[1], [0], [0], [1], [0, 0, 1, 1], [], []>} : vector<16x128xf32>, vector<128x256xf32>, vector<16x256xf32> -> vector<16x256xf32>
    %38 = arith.addf %31, %37 : vector<16x256xf32>
    %c2 = arith.constant 2 : index
    %c0_33 = arith.constant 0 : index
    %c0_34 = arith.constant 0 : index
    %39 = vector.load %arg1[%c2, %c0_33, %c0_34] : memref<3x16x16xf32, #tpu.memory_space<vmem>>, vector<1x16x16xf32>
    %40 = vector.shape_cast %39 : vector<1x16x16xf32> to vector<16x16xf32>
    %cst_35 = arith.constant dense<0.000000e+00> : vector<16x128xf32>
    %41 = tpu.matmul %40, %21, %cst_35 {dimension_numbers = #tpu.dot_dimension_numbers<[1], [0], [0], [1], [0, 0, 1, 1], [], []>} : vector<16x16xf32>, vector<16x128xf32>, vector<16x128xf32> -> vector<16x128xf32>
    %c2_36 = arith.constant 2 : index
    %c0_37 = arith.constant 0 : index
    %c0_38 = arith.constant 0 : index
    %42 = vector.load %arg4[%c2_36, %c0_37, %c0_38] : memref<3x128x256xf32, #tpu.memory_space<vmem>>, vector<1x128x256xf32>
    %43 = vector.shape_cast %42 : vector<1x128x256xf32> to vector<128x256xf32>
    %cst_39 = arith.constant dense<0.000000e+00> : vector<16x256xf32>
    %44 = tpu.matmul %41, %43, %cst_39 {dimension_numbers = #tpu.dot_dimension_numbers<[1], [0], [0], [1], [0, 0, 1, 1], [], []>} : vector<16x128xf32>, vector<128x256xf32>, vector<16x256xf32> -> vector<16x256xf32>
    %45 = arith.addf %38, %44 : vector<16x256xf32>
    %46 = vector.extract_strided_slice %45 {offsets = [0, 0], sizes = [16, 128], strides = [1, 1]} : vector<16x256xf32> to vector<16x128xf32>
    %47 = vector.extract_strided_slice %45 {offsets = [0, 128], sizes = [16, 128], strides = [1, 1]} : vector<16x256xf32> to vector<16x128xf32>
    %cst_40 = arith.constant 0.000000e+00 : f32
    %48 = vector.broadcast %cst_40 : f32 to vector<16x128xf32>
    %49 = arith.subf %48, %47 : vector<16x128xf32>
    %50 = math.exp %49 : vector<16x128xf32>
    %cst_41 = arith.constant 1.000000e+00 : f32
    %51 = vector.broadcast %cst_41 : f32 to vector<16x128xf32>
    %52 = arith.addf %51, %50 : vector<16x128xf32>
    %cst_42 = arith.constant 1.000000e+00 : f32
    %53 = vector.broadcast %cst_42 : f32 to vector<16x128xf32>
    %54 = arith.divf %53, %52 : vector<16x128xf32>
    %cst_43 = arith.constant 0.000000e+00 : f32
    %55 = vector.broadcast %cst_43 : f32 to vector<16x128xf32>
    %56 = arith.cmpf oge, %46, %55 : vector<16x128xf32>
    %cst_44 = arith.constant 0.00999999977 : f32
    %57 = vector.broadcast %cst_44 : f32 to vector<16x128xf32>
    %58 = arith.mulf %57, %46 : vector<16x128xf32>
    %59 = arith.select %56, %46, %58 : vector<16x128xi1>, vector<16x128xf32>
    %60 = arith.mulf %54, %59 : vector<16x128xf32>
    %c0_45 = arith.constant 0 : index
    %c0_46 = arith.constant 0 : index
    %c0_47 = arith.constant 0 : index
    %61 = vector.load %arg9[%c0_45, %c0_46, %c0_47] : memref<1x16x128xf32, #tpu.memory_space<vmem>>, vector<1x16x128xf32>
    %62 = vector.shape_cast %61 : vector<1x16x128xf32> to vector<16x128xf32>
    %63 = vector.shape_cast %60 : vector<16x128xf32> to vector<1x16x128xf32>
    tpu.vector_store %arg9[%c0_45, %c0_46, %c0_47], %63 {strides = array<i32>} : memref<1x16x128xf32, #tpu.memory_space<vmem>>, vector<1x16x128xf32>,
    return
  }
  func.func @transform_0(%arg0: i32) -> (i32, i32, i32) {
    %c0_i32 = arith.constant 0 : i32
    %c0_i32_0 = arith.constant 0 : i32
    %c0_i32_1 = arith.constant 0 : i32
    %c0_i32_2 = arith.constant 0 : i32
    return %c0_i32, %c0_i32_0, %c0_i32_1 : i32, i32, i32
  }
  func.func @transform_1(%arg0: i32) -> (i32, i32) {
    %c0_i32 = arith.constant 0 : i32
    %c0_i32_0 = arith.constant 0 : i32
    %c0_i32_1 = arith.constant 0 : i32
    return %c0_i32, %c0_i32_0 : i32, i32
  }
  func.func @transform_2(%arg0: i32) -> (i32, i32) {
    %c0_i32 = arith.constant 0 : i32
    %c0_i32_0 = arith.constant 0 : i32
    %c0_i32_1 = arith.constant 0 : i32
    return %c0_i32, %c0_i32_0 : i32, i32
  }
  func.func @transform_3(%arg0: i32) -> (i32, i32, i32) {
    %c0_i32 = arith.constant 0 : i32
    %c0_i32_0 = arith.constant 0 : i32
    %c0_i32_1 = arith.constant 0 : i32
    %c0_i32_2 = arith.constant 0 : i32
    return %c0_i32, %c0_i32_0, %c0_i32_1 : i32, i32, i32
  }
  func.func @transform_4(%arg0: i32) -> (i32, i32) {
    %c0_i32 = arith.constant 0 : i32
    %c0_i32_0 = arith.constant 0 : i32
    %c0_i32_1 = arith.constant 0 : i32
    return %c0_i32, %c0_i32_0 : i32, i32
  }
  func.func @transform_5(%arg0: i32) -> (i32, i32) {
    %c0_i32 = arith.constant 0 : i32
    %c0_i32_0 = arith.constant 0 : i32
    %c0_i32_1 = arith.constant 0 : i32
    return %c0_i32, %c0_i32_0 : i32, i32
  }
  func.func @transform_6(%arg0: i32) -> (i32, i32) {
    %c0_i32 = arith.constant 0 : i32
    %c0_i32_0 = arith.constant 0 : i32
    %c0_i32_1 = arith.constant 0 : i32
    return %c0_i32, %c0_i32_0 : i32, i32
  }
  func.func @transform_7(%arg0: i32) -> (i32, i32, i32) {
    %c0_i32 = arith.constant 0 : i32
    %c0_i32_0 = arith.constant 0 : i32
    %c0_i32_1 = arith.constant 0 : i32
    return %arg0, %c0_i32, %c0_i32_0 : i32, i32, i32
  }
  func.func @transform_8(%arg0: i32) -> (i32, i32, i32) {
    %c0_i32 = arith.constant 0 : i32
    %c0_i32_0 = arith.constant 0 : i32
    %c0_i32_1 = arith.constant 0 : i32
    return %arg0, %c0_i32, %c0_i32_0 : i32, i32, i32
  }
  func.func @transform_9(%arg0: i32) -> (i32, i32, i32) {
    %c0_i32 = arith.constant 0 : i32
    %c0_i32_0 = arith.constant 0 : i32
    %c0_i32_1 = arith.constant 0 : i32
    return %arg0, %c0_i32, %c0_i32_0 : i32, i32, i32
  }
}

</mosaic_0001>

<llo_original>
// kernel: tpu_custom_call.1
$region0: #{tpu_custom_call.1}
  #allocation0 [shape = 'u32[]', space=smem, size = 0x4, offset = 0x4, fixed_abs, tag = 'smem constant byte address 0x4 - core index']
  #allocation1 [shape = 'u32[72,128]{1,0:T(1,128)}', space=vmem, size = 0x9000, scoped, tag = 'internal scratch']
  %s0 = inlined_call_operand.hbm [shape: f32[3,16,16], index: 0, kind: input, shape index: {}]
  %s1 = inlined_call_operand.hbm [shape: f32[64,128], index: 1, kind: input, shape index: {}]
  %s2 = inlined_call_operand.vmem [shape: f32[1,128], index: 2, kind: input, shape index: {}]
  %s3 = inlined_call_operand.hbm [shape: f32[3,128,256], index: 3, kind: input, shape index: {}]
  %s4 = inlined_call_operand.vmem [shape: f32[1,256], index: 4, kind: input, shape index: {}]
  %s5 = inlined_call_operand.hbm [shape: f32[64,128], index: 5, kind: input, shape index: {}]
  %s6 = inlined_call_operand.vmem [shape: f32[1,128], index: 6, kind: input, shape index: {}]
  %s7 = inlined_call_operand.hbm [shape: f32[2,16,64], index: 7, kind: input, shape index: {}]
  %s8 = inlined_call_operand.hbm [shape: f32[2,16,128], index: 8, kind: output, shape index: {0}]
  %s9 = inlined_call_operand.hbm [shape: f32[2,16,128], index: 9, kind: output, shape index: {1}]
  %10 = xla_tuple %s8, %s9
  %s11 = sld [smem:[#allocation0]]
  $region93: #{tpu_custom_call.1} parent=0
    _
  %s13 = ssub.s32 1, %s11
  %s14 = scalar_select 0, %s13, %s11
  $region1: #{tpu_custom_call.1} parent=0
    #allocation2 [shape = 'u8[24576]{0}', space=vmem, size = 0x6000, scoped, tag = 'input window, operand 0, single buffered']
    #allocation3 [shape = 's32[2]{0}', space=sflag, size = 0x8, scoped, tag = 'scoped memory for tpu_custom_call.1']
    #allocation4 [shape = 's32[2]{0}', space=sflag, size = 0x8, scoped, tag = 'scoped memory for tpu_custom_call.1']
    #allocation5 [shape = 'u8[32768]{0}', space=vmem, size = 0x8000, scoped, tag = 'input window, operand 1, single buffered']
    #allocation6 [shape = 's32[1]{0}', space=sflag, size = 0x4, scoped, tag = 'scoped memory for tpu_custom_call.1']
    #allocation7 [shape = 'u8[393216]{0}', space=vmem, size = 0x60000, scoped, tag = 'input window, operand 3, single buffered']
    #allocation8 [shape = 'u8[32768]{0}', space=vmem, size = 0x8000, scoped, tag = 'input window, operand 5, single buffered']
    #allocation9 [shape = 's32[1]{0}', space=sflag, size = 0x4, scoped, tag = 'scoped memory for tpu_custom_call.1']
    #allocation10 [shape = 'u8[16384]{0}', space=vmem, size = 0x4000, scoped, tag = 'input window, operand 7']
    #allocation11 [shape = 'u8[16384]{0}', space=vmem, size = 0x4000, scoped, tag = 'output window, operand 0']
    #allocation12 [shape = 'u8[16384]{0}', space=vmem, size = 0x4000, scoped, tag = 'output window, operand 1']
    #allocation13 [shape = 's32[2]{0}', space=sflag, size = 0x8, scoped, tag = 'scoped memory for tpu_custom_call.1']
    %15 = vsyncpa [#allocation3], 0
    %16 = vsyncpa [#allocation6], 0
    %17 = vsyncpa [#allocation9], 0
    %18 = vsyncpa [#allocation4], 0
    %s19 = scalar_lea.sflag [#allocation4], 1
    %20 = vsyncpa %s19, 0
    %21 = vsyncpa [#allocation13], 0
    %s22 = scalar_lea.sflag [#allocation13], 1
    %23 = vsyncpa %s22, 0
    loop: start=0, step=1, limit=4
    $region2: #{tpu_custom_call.1} parent=1 // loop_pre_header
      _
    $region3: #{tpu_custom_call.1} parent=1 // loop_header
      %s25 = sphi 0, %s29
      %p26 = scmp.ge.s32.totalorder %s25, 4
      %s33 = sphi 0, %s33
      %s35 = sphi 0, %s33
      %s36 = sphi 0, %s35
      %s50 = sphi 0, %s36
      %s54 = sphi 0, %s54
      %s56 = sphi 0, %s54
      %s57 = sphi 0, %s56
      %s71 = sphi 0, %s57
      %s75 = sphi 0, %s75
      %s77 = sphi 0, %s75
      %s78 = sphi 0, %s77
      %s92 = sphi 0, %s78
      %s96 = sphi 0, %s96
      %s98 = sphi 0, %s96
      %s99 = sphi 0, %s98
      %s113 = sphi 0, %s99
      %s117 = sphi 0, %s117
      %s119 = sphi 0, %s117
      %s120 = sphi 0, %s119
      %s134 = sphi 0, %s120
      %s138 = sphi 0, %s138
      %s140 = sphi 0, %s138
      %s141 = sphi 0, %s140
      %s155 = sphi 0, %s141
      %s159 = sphi 0, %s159
      %s161 = sphi 0, %s159
      %s162 = sphi 0, %s161
      %s176 = sphi 0, %s162
      %s182 = sphi 0, %s184
      %s185 = sphi 0, %s182
      %s186 = sphi 0, %s185
      %s202 = sphi 0, %s186
      %s208 = sphi 0, %s210
      %s211 = sphi 0, %s208
      %s212 = sphi 0, %s211
      %s228 = sphi 0, %s212
      %s234 = sphi 0, %s236
      %s237 = sphi 0, %s234
      %s238 = sphi 0, %s237
      %s254 = sphi 0, %s238
    $region4: #{tpu_custom_call.1} parent=1 // loop_header_branch
      %28 = sbr.rel (%p26) target = $region8
    $region5: #{tpu_custom_call.1} parent=1 // loop_body
      %s30 = ssub.s32 %s25, 1
      %s31 = ssub.s32 %s25, 2
      %s32 = sadd.s32 %s25, 1
      %s34 = sadd.s32 %s33, 1
      %p37 = scmp.eq.s32.totalorder %s25, 1
      %p38 = scmp.ne.s32.totalorder %s33, %s35
      %p39 = scmp.eq.s32.totalorder %s25, 0
      %p40 = por %p38, %p39
      %p41 = scmp.ne.s32.totalorder %s33, %s35
      %p42 = scmp.eq.s32.totalorder %s30, 1
      %p43 = por %p41, %p42
      %p44 = scmp.ne.s32.totalorder %s35, %s36
      %p45 = scmp.eq.s32.totalorder %s30, 0
      %p46 = por %p44, %p45
      %p47 = scmp.ne.s32.totalorder %s35, %s36
      %p48 = scmp.eq.s32.totalorder %s31, 1
      %p49 = por %p47, %p48
      %p51 = scmp.ne.s32.totalorder %s36, %s50
      %p52 = scmp.eq.s32.totalorder %s31, 0
      %p53 = por %p51, %p52
      %s55 = sadd.s32 %s54, 1
      %p58 = scmp.eq.s32.totalorder %s25, 1
      %p59 = scmp.ne.s32.totalorder %s54, %s56
      %p60 = scmp.eq.s32.totalorder %s25, 0
      %p61 = por %p59, %p60
      %p62 = scmp.ne.s32.totalorder %s54, %s56
      %p63 = scmp.eq.s32.totalorder %s30, 1
      %p64 = por %p62, %p63
      %p65 = scmp.ne.s32.totalorder %s56, %s57
      %p66 = scmp.eq.s32.totalorder %s30, 0
      %p67 = por %p65, %p66
      %p68 = scmp.ne.s32.totalorder %s56, %s57
      %p69 = scmp.eq.s32.totalorder %s31, 1
      %p70 = por %p68, %p69
      %p72 = scmp.ne.s32.totalorder %s57, %s71
      %p73 = scmp.eq.s32.totalorder %s31, 0
      %p74 = por %p72, %p73
      %s76 = sadd.s32 %s75, 1
      %p79 = scmp.eq.s32.totalorder %s25, 1
      %p80 = scmp.ne.s32.totalorder %s75, %s77
      %p81 = scmp.eq.s32.totalorder %s25, 0
      %p82 = por %p80, %p81
      %p83 = scmp.ne.s32.totalorder %s75, %s77
      %p84 = scmp.eq.s32.totalorder %s30, 1
      %p85 = por %p83, %p84
      %p86 = scmp.ne.s32.totalorder %s77, %s78
      %p87 = scmp.eq.s32.totalorder %s30, 0
      %p88 = por %p86, %p87
      %p89 = scmp.ne.s32.totalorder %s77, %s78
      %p90 = scmp.eq.s32.totalorder %s31, 1
      %p91 = por %p89, %p90
      %p93 = scmp.ne.s32.totalorder %s78, %s92
      %p94 = scmp.eq.s32.totalorder %s31, 0
      %p95 = por %p93, %p94
      %s97 = sadd.s32 %s96, 1
      %p100 = scmp.eq.s32.totalorder %s25, 1
      %p101 = scmp.ne.s32.totalorder %s96, %s98
      %p102 = scmp.eq.s32.totalorder %s25, 0
      %p103 = por %p101, %p102
      %p104 = scmp.ne.s32.totalorder %s96, %s98
      %p105 = scmp.eq.s32.totalorder %s30, 1
      %p106 = por %p104, %p105
      %p107 = scmp.ne.s32.totalorder %s98, %s99
      %p108 = scmp.eq.s32.totalorder %s30, 0
      %p109 = por %p107, %p108
      %p110 = scmp.ne.s32.totalorder %s98, %s99
      %p111 = scmp.eq.s32.totalorder %s31, 1
      %p112 = por %p110, %p111
      %p114 = scmp.ne.s32.totalorder %s99, %s113
      %p115 = scmp.eq.s32.totalorder %s31, 0
      %p116 = por %p114, %p115
      %s118 = sadd.s32 %s117, 1
      %p121 = scmp.eq.s32.totalorder %s25, 1
      %p122 = scmp.ne.s32.totalorder %s117, %s119
      %p123 = scmp.eq.s32.totalorder %s25, 0
      %p124 = por %p122, %p123
      %p125 = scmp.ne.s32.totalorder %s117, %s119
      %p126 = scmp.eq.s32.totalorder %s30, 1
      %p127 = por %p125, %p126
      %p128 = scmp.ne.s32.totalorder %s119, %s120
      %p129 = scmp.eq.s32.totalorder %s30, 0
      %p130 = por %p128, %p129
      %p131 = scmp.ne.s32.totalorder %s119, %s120
      %p132 = scmp.eq.s32.totalorder %s31, 1
      %p133 = por %p131, %p132
      %p135 = scmp.ne.s32.totalorder %s120, %s134
      %p136 = scmp.eq.s32.totalorder %s31, 0
      %p137 = por %p135, %p136
      %s139 = sadd.s32 %s138, 1
      %p142 = scmp.eq.s32.totalorder %s25, 1
      %p143 = scmp.ne.s32.totalorder %s138, %s140
      %p144 = scmp.eq.s32.totalorder %s25, 0
      %p145 = por %p143, %p144
      %p146 = scmp.ne.s32.totalorder %s138, %s140
      %p147 = scmp.eq.s32.totalorder %s30, 1
      %p148 = por %p146, %p147
      %p149 = scmp.ne.s32.totalorder %s140, %s141
      %p150 = scmp.eq.s32.totalorder %s30, 0
      %p151 = por %p149, %p150
      %p152 = scmp.ne.s32.totalorder %s140, %s141
      %p153 = scmp.eq.s32.totalorder %s31, 1
      %p154 = por %p152, %p153
      %p156 = scmp.ne.s32.totalorder %s141, %s155
      %p157 = scmp.eq.s32.totalorder %s31, 0
      %p158 = por %p156, %p157
      %s160 = sadd.s32 %s159, 1
      %p163 = scmp.eq.s32.totalorder %s25, 1
      %p164 = scmp.ne.s32.totalorder %s159, %s161
      %p165 = scmp.eq.s32.totalorder %s25, 0
      %p166 = por %p164, %p165
      %p167 = scmp.ne.s32.totalorder %s159, %s161
      %p168 = scmp.eq.s32.totalorder %s30, 1
      %p169 = por %p167, %p168
      %p170 = scmp.ne.s32.totalorder %s161, %s162
      %p171 = scmp.eq.s32.totalorder %s30, 0
      %p172 = por %p170, %p171
      %p173 = scmp.ne.s32.totalorder %s161, %s162
      %p174 = scmp.eq.s32.totalorder %s31, 1
      %p175 = por %p173, %p174
      %p177 = scmp.ne.s32.totalorder %s162, %s176
      %p178 = scmp.eq.s32.totalorder %s31, 0
      %p179 = por %p177, %p178
      %s180 = ssub.s32 %s25, %s32
      %p181 = scmp.eq.s32.totalorder %s180, 0
      %s183 = sadd.s32 %s182, 1
      %s184 = scalar_select %p181, %s182, %s183
      %p187 = pneg %p181
      %p188 = scmp.eq.s32.totalorder %s25, 1
      %p189 = por %p187, %p188
      %p190 = scmp.ne.s32.totalorder %s182, %s185
      %p191 = scmp.eq.s32.totalorder %s25, 0
      %p192 = por %p190, %p191
      %p193 = scmp.ne.s32.totalorder %s182, %s185
      %p194 = scmp.eq.s32.totalorder %s30, 1
      %p195 = por %p193, %p194
      %p196 = scmp.ne.s32.totalorder %s185, %s186
      %p197 = scmp.eq.s32.totalorder %s30, 0
      %p198 = por %p196, %p197
      %p199 = scmp.ne.s32.totalorder %s185, %s186
      %p200 = scmp.eq.s32.totalorder %s31, 1
      %p201 = por %p199, %p200
      %p203 = scmp.ne.s32.totalorder %s186, %s202
      %p204 = scmp.eq.s32.totalorder %s31, 0
      %p205 = por %p203, %p204
      %s206 = ssub.s32 %s25, %s32
      %p207 = scmp.eq.s32.totalorder %s206, 0
      %s209 = sadd.s32 %s208, 1
      %s210 = scalar_select %p207, %s208, %s209
      %p213 = pneg %p207
      %p214 = scmp.eq.s32.totalorder %s25, 1
      %p215 = por %p213, %p214
      %p216 = scmp.ne.s32.totalorder %s208, %s211
      %p217 = scmp.eq.s32.totalorder %s25, 0
      %p218 = por %p216, %p217
      %p219 = scmp.ne.s32.totalorder %s208, %s211
      %p220 = scmp.eq.s32.totalorder %s30, 1
      %p221 = por %p219, %p220
      %p222 = scmp.ne.s32.totalorder %s211, %s212
      %p223 = scmp.eq.s32.totalorder %s30, 0
      %p224 = por %p222, %p223
      %p225 = scmp.ne.s32.totalorder %s211, %s212
      %p226 = scmp.eq.s32.totalorder %s31, 1
      %p227 = por %p225, %p226
      %p229 = scmp.ne.s32.totalorder %s212, %s228
      %p230 = scmp.eq.s32.totalorder %s31, 0
      %p231 = por %p229, %p230
      %s232 = ssub.s32 %s25, %s32
      %p233 = scmp.eq.s32.totalorder %s232, 0
      %s235 = sadd.s32 %s234, 1
      %s236 = scalar_select %p233, %s234, %s235
      %p239 = pneg %p233
      %p240 = scmp.eq.s32.totalorder %s25, 1
      %p241 = por %p239, %p240
      %p242 = scmp.ne.s32.totalorder %s234, %s237
      %p243 = scmp.eq.s32.totalorder %s25, 0
      %p244 = por %p242, %p243
      %p245 = scmp.ne.s32.totalorder %s234, %s237
      %p246 = scmp.eq.s32.totalorder %s30, 1
      %p247 = por %p245, %p246
      %p248 = scmp.ne.s32.totalorder %s237, %s238
      %p249 = scmp.eq.s32.totalorder %s30, 0
      %p250 = por %p248, %p249
      %p251 = scmp.ne.s32.totalorder %s237, %s238
      %p252 = scmp.eq.s32.totalorder %s31, 1
      %p253 = por %p251, %p252
      %p255 = scmp.ne.s32.totalorder %s238, %s254
      %p256 = scmp.eq.s32.totalorder %s31, 0
      %p257 = por %p255, %p256
      %p258 = scmp.le.s32.totalorder 1, %s25
      %p259 = scmp.lt.s32.totalorder %s25, 3
      %p260 = pnand %p258, %p259
      %p261 = pneg %p260
      // Predicated region
      $region9: #{tpu_custom_call.1} parent=5 // pred_check
        _
      $region10: #{tpu_custom_call.1} parent=5 // pred_check_branch
        %263 = sbr.rel (%p260) target = $region12
      $region11: #{tpu_custom_call.1} parent=5 // pred_region
        %s264 = ssub.s32 %s25, 1
        // Predicated region
        $region13: #{tpu_custom_call.1} parent=11 // pred_check
          %p265 = pneg %p46
        $region14: #{tpu_custom_call.1} parent=11 // pred_check_branch
          %267 = sbr.rel (%p265) target = $region16
        $region15: #{tpu_custom_call.1} parent=11 // pred_region
          %269 = vsyncadd [#allocation3], 0
          %s270 = sshll.u32 %s0, 4
          %s271 = int_to_ptr.hbm [resolvable:$true] %s270
          %s272 = sshll.u32 [#allocation2], 4
          %s273 = int_to_ptr.vmem [resolvable:$true] %s272
          %278 = dma.hbm_to_vmem [thread:$0]  %s271, 768, %s273, [#allocation3], 128, 128, 8
        $region16: #{tpu_custom_call.1} parent=11 // pred_fallthru
          _
        // Predicated region
        $region17: #{tpu_custom_call.1} parent=11 // pred_check
          %p279 = pneg %p67
        $region18: #{tpu_custom_call.1} parent=11 // pred_check_branch
          %281 = sbr.rel (%p279) target = $region20
        $region19: #{tpu_custom_call.1} parent=11 // pred_region
          %283 = vsyncadd [#allocation6], 0
          %s284 = sshll.u32 %s1, 4
          %s285 = int_to_ptr.hbm [resolvable:$true] %s284
          %s286 = sshll.u32 [#allocation5], 4
          %s287 = int_to_ptr.vmem [resolvable:$true] %s286
          %292 = dma.hbm_to_vmem [thread:$0]  %s285, 1024, %s287, [#allocation6], 128, 128, 8
        $region20: #{tpu_custom_call.1} parent=11 // pred_fallthru
          _
        // Predicated region
        $region21: #{tpu_custom_call.1} parent=11 // pred_check
          %p293 = pneg %p88
        $region22: #{tpu_custom_call.1} parent=11 // pred_check_branch
          %295 = sbr.rel (%p293) target = $region24
        $region23: #{tpu_custom_call.1} parent=11 // pred_region
          _
        $region24: #{tpu_custom_call.1} parent=11 // pred_fallthru
          _
        // Predicated region
        $region25: #{tpu_custom_call.1} parent=11 // pred_check
          %p296 = pneg %p109
        $region26: #{tpu_custom_call.1} parent=11 // pred_check_branch
          %298 = sbr.rel (%p296) target = $region28
        $region27: #{tpu_custom_call.1} parent=11 // pred_region
          %300 = vsyncadd [#allocation6], 0
          %s301 = sshll.u32 %s3, 4
          %s302 = int_to_ptr.hbm [resolvable:$true] %s301
          %s303 = sshll.u32 [#allocation7], 4
          %s304 = int_to_ptr.vmem [resolvable:$true] %s303
          %309 = dma.hbm_to_vmem [thread:$0]  %s302, 12288, %s304, [#allocation6], 256, 256, 16
        $region28: #{tpu_custom_call.1} parent=11 // pred_fallthru
          _
        // Predicated region
        $region29: #{tpu_custom_call.1} parent=11 // pred_check
          %p310 = pneg %p130
        $region30: #{tpu_custom_call.1} parent=11 // pred_check_branch
          %312 = sbr.rel (%p310) target = $region32
        $region31: #{tpu_custom_call.1} parent=11 // pred_region
          _
        $region32: #{tpu_custom_call.1} parent=11 // pred_fallthru
          _
        // Predicated region
        $region33: #{tpu_custom_call.1} parent=11 // pred_check
          %p313 = pneg %p151
        $region34: #{tpu_custom_call.1} parent=11 // pred_check_branch
          %315 = sbr.rel (%p313) target = $region36
        $region35: #{tpu_custom_call.1} parent=11 // pred_region
          %317 = vsyncadd [#allocation9], 0
          %s318 = sshll.u32 %s5, 4
          %s319 = int_to_ptr.hbm [resolvable:$true] %s318
          %s320 = sshll.u32 [#allocation8], 4
          %s321 = int_to_ptr.vmem [resolvable:$true] %s320
          %326 = dma.hbm_to_vmem [thread:$0]  %s319, 1024, %s321, [#allocation9], 128, 128, 8
        $region36: #{tpu_custom_call.1} parent=11 // pred_fallthru
          _
        // Predicated region
        $region37: #{tpu_custom_call.1} parent=11 // pred_check
          %p327 = pneg %p172
        $region38: #{tpu_custom_call.1} parent=11 // pred_check_branch
          %329 = sbr.rel (%p327) target = $region40
        $region39: #{tpu_custom_call.1} parent=11 // pred_region
          _
        $region40: #{tpu_custom_call.1} parent=11 // pred_fallthru
          _
      $region12: #{tpu_custom_call.1} parent=5 // pred_fallthru
        _
      %p330 = scmp.lt.s32.totalorder %s25, 2
      // Predicated region
      $region41: #{tpu_custom_call.1} parent=5 // pred_check
        %p331 = pneg %p330
      $region42: #{tpu_custom_call.1} parent=5 // pred_check_branch
        %333 = sbr.rel (%p331) target = $region44
      $region43: #{tpu_custom_call.1} parent=5 // pred_region
        // Predicated region
        $region45: #{tpu_custom_call.1} parent=43 // pred_check
          %p334 = pneg %p192
        $region46: #{tpu_custom_call.1} parent=43 // pred_check_branch
          %336 = sbr.rel (%p334) target = $region48
        $region47: #{tpu_custom_call.1} parent=43 // pred_region
          %s337 = sand.u32 %s25, 1
          %s338 = scalar_lea.sflag [#allocation3], %s337
          %s339 = sand.u32 %s182, 1
          %s340 = smul.addr %s339, 16
          %s341 = scalar_lea.vmem [#allocation10], %s340
          %343 = vsyncadd %s338, 0
          %s344 = smul.addr %s25, 2
          %s345 = smul.addr %s344, 8
          %s346 = scalar_lea.hbm %s7, %s345
          %s347 = sshll.u32 %s346, 4
          %s348 = int_to_ptr.hbm [resolvable:$true] %s347
          %s349 = sshll.u32 %s341, 4
          %s350 = int_to_ptr.vmem [resolvable:$true] %s349
          %355 = dma.hbm_to_vmem [thread:$0]  %s348, 256, %s350, %s338, 128, 128, 8
        $region48: #{tpu_custom_call.1} parent=43 // pred_fallthru
          _
      $region44: #{tpu_custom_call.1} parent=5 // pred_fallthru
        _
      %p356 = scmp.le.s32.totalorder 1, %s25
      %p357 = scmp.lt.s32.totalorder %s25, 3
      %p358 = pnand %p356, %p357
      %p359 = pneg %p358
      // Predicated region
      $region49: #{tpu_custom_call.1} parent=5 // pred_check
        _
      $region50: #{tpu_custom_call.1} parent=5 // pred_check_branch
        %361 = sbr.rel (%p358) target = $region52
      $region51: #{tpu_custom_call.1} parent=5 // pred_region
        %s362 = ssub.s32 %s25, 1
        // Predicated region
        $region53: #{tpu_custom_call.1} parent=51 // pred_check
          %p363 = pneg %p46
        $region54: #{tpu_custom_call.1} parent=51 // pred_check_branch
          %365 = sbr.rel (%p363) target = $region56
        $region55: #{tpu_custom_call.1} parent=51 // pred_region
          %367 = dma.done [#allocation3], 768
        $region56: #{tpu_custom_call.1} parent=51 // pred_fallthru
          _
        // Predicated region
        $region57: #{tpu_custom_call.1} parent=51 // pred_check
          %p368 = pneg %p67
        $region58: #{tpu_custom_call.1} parent=51 // pred_check_branch
          %370 = sbr.rel (%p368) target = $region60
        $region59: #{tpu_custom_call.1} parent=51 // pred_region
          %372 = dma.done [#allocation6], 1024
        $region60: #{tpu_custom_call.1} parent=51 // pred_fallthru
          _
        // Predicated region
        $region61: #{tpu_custom_call.1} parent=51 // pred_check
          %p373 = pneg %p109
        $region62: #{tpu_custom_call.1} parent=51 // pred_check_branch
          %375 = sbr.rel (%p373) target = $region64
        $region63: #{tpu_custom_call.1} parent=51 // pred_region
          %377 = dma.done [#allocation6], 12288
        $region64: #{tpu_custom_call.1} parent=51 // pred_fallthru
          _
        // Predicated region
        $region65: #{tpu_custom_call.1} parent=51 // pred_check
          %p378 = pneg %p151
        $region66: #{tpu_custom_call.1} parent=51 // pred_check_branch
          %380 = sbr.rel (%p378) target = $region68
        $region67: #{tpu_custom_call.1} parent=51 // pred_region
          %382 = dma.done [#allocation9], 1024
        $region68: #{tpu_custom_call.1} parent=51 // pred_fallthru
          _
        %s383 = sand.u32 %s30, 1
        %s384 = scalar_lea.sflag [#allocation3], %s383
        %s385 = sand.u32 %s185, 1
        %s386 = smul.addr %s385, 16
        %s387 = scalar_lea.vmem [#allocation10], %s386
        // Predicated region
        $region69: #{tpu_custom_call.1} parent=51 // pred_check
          %p388 = pneg %p198
        $region70: #{tpu_custom_call.1} parent=51 // pred_check_branch
          %390 = sbr.rel (%p388) target = $region72
        $region71: #{tpu_custom_call.1} parent=51 // pred_region
          %392 = dma.done %s384, 256
        $region72: #{tpu_custom_call.1} parent=51 // pred_fallthru
          _
        %p393 = pneg %p46
        %p394 = pneg %p43
        %p395 = pneg %p67
        %p396 = pneg %p64
        %p397 = pneg %p88
        %p398 = pneg %p85
        %p399 = pneg %p109
        %p400 = pneg %p106
        %p401 = pneg %p130
        %p402 = pneg %p127
        %p403 = pneg %p151
        %p404 = pneg %p148
        %p405 = pneg %p172
        %p406 = pneg %p169
        %s407 = sand.u32 %s30, 1
        %s408 = scalar_lea.sflag [#allocation3], %s407
        %s409 = sand.u32 %s185, 1
        %s410 = smul.addr %s409, 16
        %s411 = scalar_lea.vmem [#allocation10], %s410
        %p412 = pneg %p198
        %p413 = pneg %p195
        %p414 = pneg %p224
        %p415 = pneg %p221
        %s416 = sand.u32 %s211, 1
        %s417 = scalar_lea.sflag [#allocation4], %s416
        %s418 = sand.u32 %s211, 1
        %s419 = smul.addr %s418, 16
        %s420 = scalar_lea.vmem [#allocation11], %s419
        %p421 = pneg %p250
        %p422 = pneg %p247
        %s423 = sand.u32 %s237, 1
        %s424 = scalar_lea.sflag [#allocation13], %s423
        %s425 = sand.u32 %s237, 1
        %s426 = smul.addr %s425, 16
        %s427 = scalar_lea.vmem [#allocation12], %s426
        %v428 = vld [vmem:[%s387] sm:$0xff]
        %v429 = vld [vmem:[%s387 + $0x8] sm:$0xff]
        %v430 = vld [vmem:[#allocation8] sm:$0xff]
        %v431 = vld [vmem:[#allocation8 + $0x8] sm:$0xff]
        %v432 = vld [vmem:[#allocation8 + $0x10] sm:$0xff]
        %v433 = vld [vmem:[#allocation8 + $0x18] sm:$0xff]
        %v434 = vld [vmem:[#allocation8 + $0x20] sm:$0xff]
        %v435 = vld [vmem:[#allocation8 + $0x28] sm:$0xff]
        %v436 = vld [vmem:[#allocation8 + $0x30] sm:$0xff]
        %v437 = vld [vmem:[#allocation8 + $0x38] sm:$0xff]
        %v438 = vld [vmem:[%s6] sm:$0x1]
        %v440 = vperm.slane %v438, 0
        %vm442 = vcmask 523264
        %v444 = vsel %vm442, %v428, 0
        %v447 = vsel %vm442, %v429, 0
        %449 = vmatpush.msra.mxu0 0.0
        %450 = vmatpush.msra.mxu0 0.0
        %451 = vmatpush.msra.mxu0 0.0
        %452 = vmatpush.msra.mxu0 0.0
        %453 = vmatpush.msra.mxu0 0.0
        %454 = vmatpush.msra.mxu0 0.0
        %455 = vmatpush.msra.mxu0 0.0
        %456 = vmatpush.msra.mxu0 0.0
        %457 = vmatpush.msra.mxu0 %v437
        %458 = vmatpush.msra.mxu0 %v436
        %459 = vmatpush.msra.mxu0 %v435
        %460 = vmatpush.msra.mxu0 %v434
        %461 = vmatpush.msra.mxu0 %v433
        %462 = vmatpush.msra.mxu0 %v432
        %463 = vmatpush.msra.mxu0 %v431
        %464 = vmatpush.msra.mxu0 %v430
        %465 = vmatmul.f32.gmra.mxu0 %v444
        %v466 = vpop.f32.mrf.mxu0
        %v467 = vadd.f32 %v440, %v466
        %468 = vmatmul.f32.gmra.mxu0 %v447
        %v469 = vpop.f32.mrf.mxu0
        %v470 = vadd.f32 %v440, %v469
        %471 = vdwg.mxu0
        %472 = vst [vmem:[%s427] sm:$0xff] %v467
        %473 = vst [vmem:[%s427 + $0x8] sm:$0xff] %v470
        %v474 = vld [vmem:[#allocation5] sm:$0xff]
        %v475 = vld [vmem:[#allocation5 + $0x8] sm:$0xff]
        %v476 = vld [vmem:[#allocation5 + $0x10] sm:$0xff]
        %v477 = vld [vmem:[#allocation5 + $0x18] sm:$0xff]
        %v478 = vld [vmem:[#allocation5 + $0x20] sm:$0xff]
        %v479 = vld [vmem:[#allocation5 + $0x28] sm:$0xff]
        %v480 = vld [vmem:[#allocation5 + $0x30] sm:$0xff]
        %v481 = vld [vmem:[#allocation5 + $0x38] sm:$0xff]
        %v482 = vld [vmem:[%s2] sm:$0x1]
        %v484 = vperm.slane %v482, 0
        %486 = vmatpush.msra.mxu0 0.0
        %487 = vmatpush.msra.mxu0 0.0
        %488 = vmatpush.msra.mxu0 0.0
        %489 = vmatpush.msra.mxu0 0.0
        %490 = vmatpush.msra.mxu0 0.0
        %491 = vmatpush.msra.mxu0 0.0
        %492 = vmatpush.msra.mxu0 0.0
        %493 = vmatpush.msra.mxu0 0.0
        %494 = vmatpush.msra.mxu0 %v481
        %495 = vmatpush.msra.mxu0 %v480
        %496 = vmatpush.msra.mxu0 %v479
        %497 = vmatpush.msra.mxu0 %v478
        %498 = vmatpush.msra.mxu0 %v477
        %499 = vmatpush.msra.mxu0 %v476
        %500 = vmatpush.msra.mxu0 %v475
        %501 = vmatpush.msra.mxu0 %v474
        %502 = vmatmul.f32.gmra.mxu0 %v444
        %v503 = vpop.f32.mrf.mxu0
        %v504 = vadd.f32 %v484, %v503
        %505 = vmatmul.f32.gmra.mxu0 %v447
        %v506 = vpop.f32.mrf.mxu0
        %v507 = vadd.f32 %v484, %v506
        %508 = vdwg.mxu0
        %vm509 = vcmp.ge.f32.partialorder %v504, 0.0
        %vm510 = vcmp.ge.f32.partialorder %v507, 0.0
        %v511 = vmul.f32 %v504, 0.01
        %v512 = vmul.f32 %v507, 0.01
        %v513 = vsel %vm509, %v504, %v511
        %v514 = vsel %vm510, %v507, %v512
        %v515 = vld [vmem:[%s4] sm:$0x3]
        %v517 = vperm.slane %v515, 0
        %v518 = vperm.slane %v515, 1
        %v521 = vld [vmem:[#allocation2] sm:$0xff]
        %v522 = vld [vmem:[#allocation2 + $0x8] sm:$0xff]
        %vm523 = vcmask 130048
        %v525 = vsel %vm523, %v521, 0
        %v528 = vsel %vm523, %v522, 0
        %530 = vmatpush.msra.mxu0 0.0
        %531 = vmatpush.msra.mxu0 0.0
        %532 = vmatpush.msra.mxu0 0.0
        %533 = vmatpush.msra.mxu0 0.0
        %534 = vmatpush.msra.mxu0 0.0
        %535 = vmatpush.msra.mxu0 0.0
        %536 = vmatpush.msra.mxu0 0.0
        %537 = vmatpush.msra.mxu0 0.0
        %538 = vmatpush.msra.mxu0 0.0
        %539 = vmatpush.msra.mxu0 0.0
        %540 = vmatpush.msra.mxu0 0.0
        %541 = vmatpush.msra.mxu0 0.0
        %542 = vmatpush.msra.mxu0 0.0
        %543 = vmatpush.msra.mxu0 0.0
        %544 = vmatpush.msra.mxu0 %v514
        %545 = vmatpush.msra.mxu0 %v513
        %546 = vmatmul.f32.gmra.mxu0 %v525
        %v547 = vpop.f32.mrf.mxu0
        %v548 = vadd.f32 0.0, %v547
        %549 = vmatmul.f32.gmra.mxu0 %v528
        %v550 = vpop.f32.mrf.mxu0
        %v551 = vadd.f32 0.0, %v550
        %552 = vdwg.mxu0
        %v553 = vld [vmem:[#allocation7] sm:$0xff]
        %v554 = vld [vmem:[#allocation7 + $0x8] sm:$0xff]
        %v555 = vld [vmem:[#allocation7 + $0x10] sm:$0xff]
        %v556 = vld [vmem:[#allocation7 + $0x18] sm:$0xff]
        %v557 = vld [vmem:[#allocation7 + $0x20] sm:$0xff]
        %v558 = vld [vmem:[#allocation7 + $0x28] sm:$0xff]
        %v559 = vld [vmem:[#allocation7 + $0x30] sm:$0xff]
        %v560 = vld [vmem:[#allocation7 + $0x38] sm:$0xff]
        %v561 = vld [vmem:[#allocation7 + $0x40] sm:$0xff]
        %v562 = vld [vmem:[#allocation7 + $0x48] sm:$0xff]
        %v563 = vld [vmem:[#allocation7 + $0x50] sm:$0xff]
        %v564 = vld [vmem:[#allocation7 + $0x58] sm:$0xff]
        %v565 = vld [vmem:[#allocation7 + $0x60] sm:$0xff]
        %v566 = vld [vmem:[#allocation7 + $0x68] sm:$0xff]
        %v567 = vld [vmem:[#allocation7 + $0x70] sm:$0xff]
        %v568 = vld [vmem:[#allocation7 + $0x78] sm:$0xff]
        %v569 = vld [vmem:[#allocation7 + $0x80] sm:$0xff]
        %v570 = vld [vmem:[#allocation7 + $0x88] sm:$0xff]
        %v571 = vld [vmem:[#allocation7 + $0x90] sm:$0xff]
        %v572 = vld [vmem:[#allocation7 + $0x98] sm:$0xff]
        %v573 = vld [vmem:[#allocation7 + $0xa0] sm:$0xff]
        %v574 = vld [vmem:[#allocation7 + $0xa8] sm:$0xff]
        %v575 = vld [vmem:[#allocation7 + $0xb0] sm:$0xff]
        %v576 = vld [vmem:[#allocation7 + $0xb8] sm:$0xff]
        %v577 = vld [vmem:[#allocation7 + $0xc0] sm:$0xff]
        %v578 = vld [vmem:[#allocation7 + $0xc8] sm:$0xff]
        %v579 = vld [vmem:[#allocation7 + $0xd0] sm:$0xff]
        %v580 = vld [vmem:[#allocation7 + $0xd8] sm:$0xff]
        %v581 = vld [vmem:[#allocation7 + $0xe0] sm:$0xff]
        %v582 = vld [vmem:[#allocation7 + $0xe8] sm:$0xff]
        %v583 = vld [vmem:[#allocation7 + $0xf0] sm:$0xff]
        %v584 = vld [vmem:[#allocation7 + $0xf8] sm:$0xff]
        %585 = vmatpush.msra.mxu0 %v583
        %586 = vmatpush.msra.mxu0 %v581
        %587 = vmatpush.msra.mxu0 %v579
        %588 = vmatpush.msra.mxu0 %v577
        %589 = vmatpush.msra.mxu0 %v575
        %590 = vmatpush.msra.mxu0 %v573
        %591 = vmatpush.msra.mxu0 %v571
        %592 = vmatpush.msra.mxu0 %v569
        %593 = vmatpush.msra.mxu0 %v567
        %594 = vmatpush.msra.mxu0 %v565
        %595 = vmatpush.msra.mxu0 %v563
        %596 = vmatpush.msra.mxu0 %v561
        %597 = vmatpush.msra.mxu0 %v559
        %598 = vmatpush.msra.mxu0 %v557
        %599 = vmatpush.msra.mxu0 %v555
        %600 = vmatpush.msra.mxu0 %v553
        %601 = vmatmul.f32.gmra.mxu0 %v548
        %v602 = vpop.f32.mrf.mxu0
        %v603 = vadd.f32 0.0, %v602
        %604 = vmatmul.f32.gmra.mxu0 %v551
        %v605 = vpop.f32.mrf.mxu0
        %v606 = vadd.f32 0.0, %v605
        %607 = vdwg.mxu0
        %608 = vmatpush.msra.mxu0 %v584
        %609 = vmatpush.msra.mxu0 %v582
        %610 = vmatpush.msra.mxu0 %v580
        %611 = vmatpush.msra.mxu0 %v578
        %612 = vmatpush.msra.mxu0 %v576
        %613 = vmatpush.msra.mxu0 %v574
        %614 = vmatpush.msra.mxu0 %v572
        %615 = vmatpush.msra.mxu0 %v570
        %616 = vmatpush.msra.mxu0 %v568
        %617 = vmatpush.msra.mxu0 %v566
        %618 = vmatpush.msra.mxu0 %v564
        %619 = vmatpush.msra.mxu0 %v562
        %620 = vmatpush.msra.mxu0 %v560
        %621 = vmatpush.msra.mxu0 %v558
        %622 = vmatpush.msra.mxu0 %v556
        %623 = vmatpush.msra.mxu0 %v554
        %624 = vmatmul.f32.gmra.mxu0 %v548
        %v625 = vpop.f32.mrf.mxu0
        %v626 = vadd.f32 0.0, %v625
        %627 = vmatmul.f32.gmra.mxu0 %v551
        %v628 = vpop.f32.mrf.mxu0
        %v629 = vadd.f32 0.0, %v628
        %630 = vdwg.mxu0
        %v631 = vadd.f32 %v517, %v603
        %v632 = vadd.f32 %v518, %v626
        %v633 = vadd.f32 %v517, %v606
        %v634 = vadd.f32 %v518, %v629
        %s635 = scalar_lea.vmem [#allocation2], 16
        %v636 = vld [vmem:[%s635] sm:$0xff]
        %v637 = vld [vmem:[%s635 + $0x8] sm:$0xff]
        %v639 = vsel %vm523, %v636, 0
        %v642 = vsel %vm523, %v637, 0
        %644 = vmatpush.msra.mxu0 0.0
        %645 = vmatpush.msra.mxu0 0.0
        %646 = vmatpush.msra.mxu0 0.0
        %647 = vmatpush.msra.mxu0 0.0
        %648 = vmatpush.msra.mxu0 0.0
        %649 = vmatpush.msra.mxu0 0.0
        %650 = vmatpush.msra.mxu0 0.0
        %651 = vmatpush.msra.mxu0 0.0
        %652 = vmatpush.msra.mxu0 0.0
        %653 = vmatpush.msra.mxu0 0.0
        %654 = vmatpush.msra.mxu0 0.0
        %655 = vmatpush.msra.mxu0 0.0
        %656 = vmatpush.msra.mxu0 0.0
        %657 = vmatpush.msra.mxu0 0.0
        %658 = vmatpush.msra.mxu0 %v514
        %659 = vmatpush.msra.mxu0 %v513
        %660 = vmatmul.f32.gmra.mxu0 %v639
        %v661 = vpop.f32.mrf.mxu0
        %v662 = vadd.f32 0.0, %v661
        %663 = vmatmul.f32.gmra.mxu0 %v642
        %v664 = vpop.f32.mrf.mxu0
        %v665 = vadd.f32 0.0, %v664
        %666 = vdwg.mxu0
        %s667 = scalar_lea.vmem [#allocation7], 256
        %v668 = vld [vmem:[%s667] sm:$0xff]
        %v669 = vld [vmem:[%s667 + $0x8] sm:$0xff]
        %v670 = vld [vmem:[%s667 + $0x10] sm:$0xff]
        %v671 = vld [vmem:[%s667 + $0x18] sm:$0xff]
        %v672 = vld [vmem:[%s667 + $0x20] sm:$0xff]
        %v673 = vld [vmem:[%s667 + $0x28] sm:$0xff]
        %v674 = vld [vmem:[%s667 + $0x30] sm:$0xff]
        %v675 = vld [vmem:[%s667 + $0x38] sm:$0xff]
        %v676 = vld [vmem:[%s667 + $0x40] sm:$0xff]
        %v677 = vld [vmem:[%s667 + $0x48] sm:$0xff]
        %v678 = vld [vmem:[%s667 + $0x50] sm:$0xff]
        %v679 = vld [vmem:[%s667 + $0x58] sm:$0xff]
        %v680 = vld [vmem:[%s667 + $0x60] sm:$0xff]
        %v681 = vld [vmem:[%s667 + $0x68] sm:$0xff]
        %v682 = vld [vmem:[%s667 + $0x70] sm:$0xff]
        %v683 = vld [vmem:[%s667 + $0x78] sm:$0xff]
        %v684 = vld [vmem:[%s667 + $0x80] sm:$0xff]
        %v685 = vld [vmem:[%s667 + $0x88] sm:$0xff]
        %v686 = vld [vmem:[%s667 + $0x90] sm:$0xff]
        %v687 = vld [vmem:[%s667 + $0x98] sm:$0xff]
        %v688 = vld [vmem:[%s667 + $0xa0] sm:$0xff]
        %v689 = vld [vmem:[%s667 + $0xa8] sm:$0xff]
        %v690 = vld [vmem:[%s667 + $0xb0] sm:$0xff]
        %v691 = vld [vmem:[%s667 + $0xb8] sm:$0xff]
        %v692 = vld [vmem:[%s667 + $0xc0] sm:$0xff]
        %v693 = vld [vmem:[%s667 + $0xc8] sm:$0xff]
        %v694 = vld [vmem:[%s667 + $0xd0] sm:$0xff]
        %v695 = vld [vmem:[%s667 + $0xd8] sm:$0xff]
        %v696 = vld [vmem:[%s667 + $0xe0] sm:$0xff]
        %v697 = vld [vmem:[%s667 + $0xe8] sm:$0xff]
        %v698 = vld [vmem:[%s667 + $0xf0] sm:$0xff]
        %v699 = vld [vmem:[%s667 + $0xf8] sm:$0xff]
        %700 = vmatpush.msra.mxu0 %v698
        %701 = vmatpush.msra.mxu0 %v696
        %702 = vmatpush.msra.mxu0 %v694
        %703 = vmatpush.msra.mxu0 %v692
        %704 = vmatpush.msra.mxu0 %v690
        %705 = vmatpush.msra.mxu0 %v688
        %706 = vmatpush.msra.mxu0 %v686
        %707 = vmatpush.msra.mxu0 %v684
        %708 = vmatpush.msra.mxu0 %v682
        %709 = vmatpush.msra.mxu0 %v680
        %710 = vmatpush.msra.mxu0 %v678
        %711 = vmatpush.msra.mxu0 %v676
        %712 = vmatpush.msra.mxu0 %v674
        %713 = vmatpush.msra.mxu0 %v672
        %714 = vmatpush.msra.mxu0 %v670
        %715 = vmatpush.msra.mxu0 %v668
        %716 = vmatmul.f32.gmra.mxu0 %v662
        %v717 = vpop.f32.mrf.mxu0
        %v718 = vadd.f32 0.0, %v717
        %719 = vmatmul.f32.gmra.mxu0 %v665
        %v720 = vpop.f32.mrf.mxu0
        %v721 = vadd.f32 0.0, %v720
        %722 = vdwg.mxu0
        %723 = vmatpush.msra.mxu0 %v699
        %724 = vmatpush.msra.mxu0 %v697
        %725 = vmatpush.msra.mxu0 %v695
        %726 = vmatpush.msra.mxu0 %v693
        %727 = vmatpush.msra.mxu0 %v691
        %728 = vmatpush.msra.mxu0 %v689
        %729 = vmatpush.msra.mxu0 %v687
        %730 = vmatpush.msra.mxu0 %v685
        %731 = vmatpush.msra.mxu0 %v683
        %732 = vmatpush.msra.mxu0 %v681
        %733 = vmatpush.msra.mxu0 %v679
        %734 = vmatpush.msra.mxu0 %v677
        %735 = vmatpush.msra.mxu0 %v675
        %736 = vmatpush.msra.mxu0 %v673
        %737 = vmatpush.msra.mxu0 %v671
        %738 = vmatpush.msra.mxu0 %v669
        %739 = vmatmul.f32.gmra.mxu0 %v662
        %v740 = vpop.f32.mrf.mxu0
        %v741 = vadd.f32 0.0, %v740
        %742 = vmatmul.f32.gmra.mxu0 %v665
        %v743 = vpop.f32.mrf.mxu0
        %v744 = vadd.f32 0.0, %v743
        %745 = vdwg.mxu0
        %v746 = vadd.f32 %v631, %v718
        %v747 = vadd.f32 %v632, %v741
        %v748 = vadd.f32 %v633, %v721
        %v749 = vadd.f32 %v634, %v744
        %s750 = scalar_lea.vmem [#allocation2], 32
        %v751 = vld [vmem:[%s750] sm:$0xff]
        %v752 = vld [vmem:[%s750 + $0x8] sm:$0xff]
        %v754 = vsel %vm523, %v751, 0
        %v757 = vsel %vm523, %v752, 0
        %759 = vmatpush.msra.mxu0 0.0
        %760 = vmatpush.msra.mxu0 0.0
        %761 = vmatpush.msra.mxu0 0.0
        %762 = vmatpush.msra.mxu0 0.0
        %763 = vmatpush.msra.mxu0 0.0
        %764 = vmatpush.msra.mxu0 0.0
        %765 = vmatpush.msra.mxu0 0.0
        %766 = vmatpush.msra.mxu0 0.0
        %767 = vmatpush.msra.mxu0 0.0
        %768 = vmatpush.msra.mxu0 0.0
        %769 = vmatpush.msra.mxu0 0.0
        %770 = vmatpush.msra.mxu0 0.0
        %771 = vmatpush.msra.mxu0 0.0
        %772 = vmatpush.msra.mxu0 0.0
        %773 = vmatpush.msra.mxu0 %v514
        %774 = vmatpush.msra.mxu0 %v513
        %775 = vmatmul.f32.gmra.mxu0 %v754
        %v776 = vpop.f32.mrf.mxu0
        %v777 = vadd.f32 0.0, %v776
        %778 = vmatmul.f32.gmra.mxu0 %v757
        %v779 = vpop.f32.mrf.mxu0
        %v780 = vadd.f32 0.0, %v779
        %781 = vdwg.mxu0
        %s782 = scalar_lea.vmem [#allocation7], 512
        %v783 = vld [vmem:[%s782] sm:$0xff]
        %v784 = vld [vmem:[%s782 + $0x8] sm:$0xff]
        %v785 = vld [vmem:[%s782 + $0x10] sm:$0xff]
        %v786 = vld [vmem:[%s782 + $0x18] sm:$0xff]
        %v787 = vld [vmem:[%s782 + $0x20] sm:$0xff]
        %v788 = vld [vmem:[%s782 + $0x28] sm:$0xff]
        %v789 = vld [vmem:[%s782 + $0x30] sm:$0xff]
        %v790 = vld [vmem:[%s782 + $0x38] sm:$0xff]
        %v791 = vld [vmem:[%s782 + $0x40] sm:$0xff]
        %v792 = vld [vmem:[%s782 + $0x48] sm:$0xff]
        %v793 = vld [vmem:[%s782 + $0x50] sm:$0xff]
        %v794 = vld [vmem:[%s782 + $0x58] sm:$0xff]
        %v795 = vld [vmem:[%s782 + $0x60] sm:$0xff]
        %v796 = vld [vmem:[%s782 + $0x68] sm:$0xff]
        %v797 = vld [vmem:[%s782 + $0x70] sm:$0xff]
        %v798 = vld [vmem:[%s782 + $0x78] sm:$0xff]
        %v799 = vld [vmem:[%s782 + $0x80] sm:$0xff]
        %v800 = vld [vmem:[%s782 + $0x88] sm:$0xff]
        %v801 = vld [vmem:[%s782 + $0x90] sm:$0xff]
        %v802 = vld [vmem:[%s782 + $0x98] sm:$0xff]
        %v803 = vld [vmem:[%s782 + $0xa0] sm:$0xff]
        %v804 = vld [vmem:[%s782 + $0xa8] sm:$0xff]
        %v805 = vld [vmem:[%s782 + $0xb0] sm:$0xff]
        %v806 = vld [vmem:[%s782 + $0xb8] sm:$0xff]
        %v807 = vld [vmem:[%s782 + $0xc0] sm:$0xff]
        %v808 = vld [vmem:[%s782 + $0xc8] sm:$0xff]
        %v809 = vld [vmem:[%s782 + $0xd0] sm:$0xff]
        %v810 = vld [vmem:[%s782 + $0xd8] sm:$0xff]
        %v811 = vld [vmem:[%s782 + $0xe0] sm:$0xff]
        %v812 = vld [vmem:[%s782 + $0xe8] sm:$0xff]
        %v813 = vld [vmem:[%s782 + $0xf0] sm:$0xff]
        %v814 = vld [vmem:[%s782 + $0xf8] sm:$0xff]
        %815 = vmatpush.msra.mxu0 %v813
        %816 = vmatpush.msra.mxu0 %v811
        %817 = vmatpush.msra.mxu0 %v809
        %818 = vmatpush.msra.mxu0 %v807
        %819 = vmatpush.msra.mxu0 %v805
        %820 = vmatpush.msra.mxu0 %v803
        %821 = vmatpush.msra.mxu0 %v801
        %822 = vmatpush.msra.mxu0 %v799
        %823 = vmatpush.msra.mxu0 %v797
        %824 = vmatpush.msra.mxu0 %v795
        %825 = vmatpush.msra.mxu0 %v793
        %826 = vmatpush.msra.mxu0 %v791
        %827 = vmatpush.msra.mxu0 %v789
        %828 = vmatpush.msra.mxu0 %v787
        %829 = vmatpush.msra.mxu0 %v785
        %830 = vmatpush.msra.mxu0 %v783
        %831 = vmatmul.f32.gmra.mxu0 %v777
        %v832 = vpop.f32.mrf.mxu0
        %v833 = vadd.f32 0.0, %v832
        %834 = vmatmul.f32.gmra.mxu0 %v780
        %v835 = vpop.f32.mrf.mxu0
        %v836 = vadd.f32 0.0, %v835
        %837 = vdwg.mxu0
        %838 = vmatpush.msra.mxu0 %v814
        %839 = vmatpush.msra.mxu0 %v812
        %840 = vmatpush.msra.mxu0 %v810
        %841 = vmatpush.msra.mxu0 %v808
        %842 = vmatpush.msra.mxu0 %v806
        %843 = vmatpush.msra.mxu0 %v804
        %844 = vmatpush.msra.mxu0 %v802
        %845 = vmatpush.msra.mxu0 %v800
        %846 = vmatpush.msra.mxu0 %v798
        %847 = vmatpush.msra.mxu0 %v796
        %848 = vmatpush.msra.mxu0 %v794
        %849 = vmatpush.msra.mxu0 %v792
        %850 = vmatpush.msra.mxu0 %v790
        %851 = vmatpush.msra.mxu0 %v788
        %852 = vmatpush.msra.mxu0 %v786
        %853 = vmatpush.msra.mxu0 %v784
        %854 = vmatmul.f32.gmra.mxu0 %v777
        %v855 = vpop.f32.mrf.mxu0
        %v856 = vadd.f32 0.0, %v855
        %857 = vmatmul.f32.gmra.mxu0 %v780
        %v858 = vpop.f32.mrf.mxu0
        %v859 = vadd.f32 0.0, %v858
        %860 = vdwg.mxu0
        %v861 = vadd.f32 %v746, %v833
        %v862 = vadd.f32 %v747, %v856
        %v863 = vadd.f32 %v748, %v836
        %v864 = vadd.f32 %v749, %v859
        %v865 = vsub.f32 0.0, %v862
        %v866 = vsub.f32 0.0, %v864
        %v867 = vmul.f32 %v865, 1.442695
        %v868 = vpow.pop %v867
        %v869 = vmul.f32 %v866, 1.442695
        %v870 = vpow.pop %v869
        %v871 = vadd.f32 %v868, 1.0
        %v872 = vadd.f32 %v870, 1.0
        %v873 = vrcp.pop %v871
        %v874 = vmul.f32 %v871, %v873
        %v875 = vsub.f32 1.0, %v874
        %v876 = vmul.f32 %v873, %v875
        %v877 = vadd.f32 %v873, %v876
        %vm878 = vweird.f32 %v871
        %vm879 = vweird.f32 %v873
        %vm880 = vmor %vm878, %vm879
        %v881 = vsel %vm880, %v873, %v877
        %v882 = vand.u32 2147483647, %v871
        %vm883 = vcmp.eq.f32.partialorder %v882, 8.507059e+37
        %v884 = vand.u32 %v871, 2147483648
        %v885 = vor.u32 1.1754944e-38, %v884
        %v886 = vsel %vm883, %v885, %v881
        %v887 = vmul.f32 1.0, %v886
        %v888 = vrcp.pop %v872
        %v889 = vmul.f32 %v872, %v888
        %v890 = vsub.f32 1.0, %v889
        %v891 = vmul.f32 %v888, %v890
        %v892 = vadd.f32 %v888, %v891
        %vm893 = vweird.f32 %v872
        %vm894 = vweird.f32 %v888
        %vm895 = vmor %vm893, %vm894
        %v896 = vsel %vm895, %v888, %v892
        %v897 = vand.u32 2147483647, %v872
        %vm898 = vcmp.eq.f32.partialorder %v897, 8.507059e+37
        %v899 = vand.u32 %v872, 2147483648
        %v900 = vor.u32 1.1754944e-38, %v899
        %v901 = vsel %vm898, %v900, %v896
        %v902 = vmul.f32 1.0, %v901
        %vm903 = vcmp.ge.f32.partialorder %v861, 0.0
        %vm904 = vcmp.ge.f32.partialorder %v863, 0.0
        %v905 = vmul.f32 %v861, 0.01
        %v906 = vmul.f32 %v863, 0.01
        %v907 = vsel %vm903, %v861, %v905
        %v908 = vsel %vm904, %v863, %v906
        %v909 = vmul.f32 %v887, %v907
        %v910 = vmul.f32 %v902, %v908
        %911 = vst [vmem:[%s420] sm:$0xff] %v909
        %912 = vst [vmem:[%s420 + $0x8] sm:$0xff] %v910
        %s913 = sand.u32 %s211, 1
        %s914 = scalar_lea.sflag [#allocation4], %s913
        %s915 = sand.u32 %s211, 1
        %s916 = smul.addr %s915, 16
        %s917 = scalar_lea.vmem [#allocation11], %s916
        %s918 = sand.u32 %s237, 1
        %s919 = scalar_lea.sflag [#allocation13], %s918
        %s920 = sand.u32 %s237, 1
        %s921 = smul.addr %s920, 16
        %s922 = scalar_lea.vmem [#allocation12], %s921
        // Predicated region
        $region73: #{tpu_custom_call.1} parent=51 // pred_check
          %p923 = pneg %p221
        $region74: #{tpu_custom_call.1} parent=51 // pred_check_branch
          %925 = sbr.rel (%p923) target = $region76
        $region75: #{tpu_custom_call.1} parent=51 // pred_region
          %927 = vsyncadd %s914, 0
          %s928 = smul.addr %s30, 2
          %s929 = smul.addr %s928, 8
          %s930 = scalar_lea.hbm %s8, %s929
          %s931 = sshll.u32 %s917, 4
          %s932 = int_to_ptr.vmem [resolvable:$true] %s931
          %s933 = sshll.u32 %s930, 4
          %s934 = int_to_ptr.hbm [resolvable:$true] %s933
          %939 = dma.vmem_to_hbm [thread:$0]  %s932, 256, %s934, %s914, 128, 128, 8
        $region76: #{tpu_custom_call.1} parent=51 // pred_fallthru
          _
        // Predicated region
        $region77: #{tpu_custom_call.1} parent=51 // pred_check
          %p940 = pneg %p247
        $region78: #{tpu_custom_call.1} parent=51 // pred_check_branch
          %942 = sbr.rel (%p940) target = $region80
        $region79: #{tpu_custom_call.1} parent=51 // pred_region
          %944 = vsyncadd %s919, 0
          %s945 = smul.addr %s30, 2
          %s946 = smul.addr %s945, 8
          %s947 = scalar_lea.hbm %s9, %s946
          %s948 = sshll.u32 %s922, 4
          %s949 = int_to_ptr.vmem [resolvable:$true] %s948
          %s950 = sshll.u32 %s947, 4
          %s951 = int_to_ptr.hbm [resolvable:$true] %s950
          %956 = dma.vmem_to_hbm [thread:$0]  %s949, 256, %s951, %s919, 128, 128, 8
        $region80: #{tpu_custom_call.1} parent=51 // pred_fallthru
          _
      $region52: #{tpu_custom_call.1} parent=5 // pred_fallthru
        _
      %p957 = scmp.le.s32.totalorder 2, %s25
      // Predicated region
      $region81: #{tpu_custom_call.1} parent=5 // pred_check
        %p958 = pneg %p957
      $region82: #{tpu_custom_call.1} parent=5 // pred_check_branch
        %960 = sbr.rel (%p958) target = $region84
      $region83: #{tpu_custom_call.1} parent=5 // pred_region
        %s961 = ssub.s32 %s25, 2
        // Predicated region
        $region85: #{tpu_custom_call.1} parent=83 // pred_check
          %p962 = pneg %p227
        $region86: #{tpu_custom_call.1} parent=83 // pred_check_branch
          %964 = sbr.rel (%p962) target = $region88
        $region87: #{tpu_custom_call.1} parent=83 // pred_region
          %s965 = sand.u32 %s212, 1
          %s966 = scalar_lea.sflag [#allocation4], %s965
          %s967 = sand.u32 %s212, 1
          %s968 = smul.addr %s967, 16
          %s969 = scalar_lea.vmem [#allocation11], %s968
          %971 = dma.done %s966, 256
        $region88: #{tpu_custom_call.1} parent=83 // pred_fallthru
          _
        // Predicated region
        $region89: #{tpu_custom_call.1} parent=83 // pred_check
          %p972 = pneg %p253
        $region90: #{tpu_custom_call.1} parent=83 // pred_check_branch
          %974 = sbr.rel (%p972) target = $region92
        $region91: #{tpu_custom_call.1} parent=83 // pred_region
          %s975 = sand.u32 %s238, 1
          %s976 = scalar_lea.sflag [#allocation13], %s975
          %s977 = sand.u32 %s238, 1
          %s978 = smul.addr %s977, 16
          %s979 = scalar_lea.vmem [#allocation12], %s978
          %981 = dma.done %s976, 256
        $region92: #{tpu_custom_call.1} parent=83 // pred_fallthru
          _
      $region84: #{tpu_custom_call.1} parent=5 // pred_fallthru
        _
    $region6: #{tpu_custom_call.1} parent=1 // loop_footer
      %s29 = sadd.s32 1, %s25
    $region7: #{tpu_custom_call.1} parent=1 // loop_footer_branch
      %24 = sbr.rel target = $region3
    $region8: #{tpu_custom_call.1} parent=1 // loop_exit
      _
    %982 = vsyncpa [#allocation3], 1
    %s983 = scalar_lea.sflag [#allocation3], 1
    %984 = vsyncpa %s983, 1
    %985 = vsyncpa [#allocation6], 1
    %986 = vsyncpa [#allocation9], 1
    %987 = vsyncpa [#allocation4], 1
    %s988 = scalar_lea.sflag [#allocation4], 1
    %989 = vsyncpa %s988, 1
    %990 = vsyncpa [#allocation13], 1
    %s991 = scalar_lea.sflag [#allocation13], 1
    %992 = vsyncpa %s991, 1

</llo_original>
